<compile_context>
chip_gen: v7x
topology: tpu7x:2x2x1
jax: 0.10.0
libtpu: 0.0.40
codegen_flags: <defaults>
</compile_context>

<pallas_src>
import jax
import jax.numpy as jnp
from jax.experimental import pallas as pl
from jax.experimental.pallas import tpu as pltpu


_EMB_VMEM_MAX_BYTES = 4 << 20      # below this, keep the table VMEM-resident
_VOCAB_TILE_BUDGET = 24 << 20      # double-buffered weight-stream VMEM budget


def _vmem_limit(nbytes):
    """Scoped-VMEM limit: actual need + margin, capped at v7x's 64 MiB."""
    return int(min(max(nbytes * 5 // 4 + (4 << 20), 32 << 20), 64 << 20))


def _pick_vocab_tile(vocab_size, hidden, weight_bytes,
                     budget_bytes=_VOCAB_TILE_BUDGET):
    """Largest lane-aligned vocab tile whose double-buffered weight stream
    (+ f32 output tiles) fits the VMEM budget.  Prefers >= 2 tiles so the
    'parallel' vocab axis load-balances across v7x's two TensorCores."""
    v128 = pl.cdiv(vocab_size, 128) * 128
    for t in (2048, 1024, 512, 256, 128):
        if t > v128:
            continue                                  # wider than (padded) vocab
        if v128 >= 256 and t >= v128:
            continue                                  # keep >= 2 tiles (v7x)
        need = 2 * hidden * t * weight_bytes + 2 * 128 * t * 4
        if need <= budget_bytes:
            return t
    return 128


# ----------------------------------------------------------------------------
# Shared GRU gate math (PyTorch gate order r, z, n; f32 accumulation).
# ----------------------------------------------------------------------------
def _gru_finish(x, h, gh_r, gh_z, gh_n,
                w_ir_ref, w_iz_ref, w_in_ref,
                b_r_ref, b_z_ref, b_in_ref, b_hn_ref):
    gi_r = jnp.dot(x, w_ir_ref[...], preferred_element_type=jnp.float32)
    gi_z = jnp.dot(x, w_iz_ref[...], preferred_element_type=jnp.float32)
    gi_n = jnp.dot(x, w_in_ref[...], preferred_element_type=jnp.float32)
    r = jax.nn.sigmoid(gi_r + gh_r + b_r_ref[...])
    z = jax.nn.sigmoid(gi_z + gh_z + b_z_ref[...])
    n = jnp.tanh(gi_n + b_in_ref[...] + r * (gh_n + b_hn_ref[...]))
    return (1.0 - z) * n + z * h


# ----------------------------------------------------------------------------
# Kernel 1a: small embedding table (VMEM-resident) -> one-hot MXU gather + GRU.
# ----------------------------------------------------------------------------
def _embed_gru_vmem_kernel(tok_ref,       # VMEM (B, 1) int32 token ids
                           emb_ref,       # VMEM (V, E) embedding table
                           h_ref,         # VMEM (B, H) previous hidden (f32)
                           w_ir_ref, w_iz_ref, w_in_ref,   # (E, H) each
                           w_hr_ref, w_hz_ref, w_hn_ref,   # (H, H) each
                           b_r_ref, b_z_ref,               # (1, H) folded, f32
                           b_in_ref, b_hn_ref,             # (1, H) f32
                           hnew_ref):     # VMEM (B, H) out (aliased with h)
    B = h_ref.shape[0]
    V = emb_ref.shape[0]
    # Exact one-hot gather on the MXU (no per-row DMA descriptor overhead).
    tok = tok_ref[...]                                          # (B, 1)
    col = jax.lax.broadcasted_iota(jnp.int32, (B, V), 1)
    onehot = (col == tok).astype(emb_ref.dtype)
    x = jnp.dot(onehot, emb_ref[...],
                preferred_element_type=jnp.float32).astype(emb_ref.dtype)

    h = h_ref[...]
    h_c = h.astype(w_hr_ref.dtype)
    gh_r = jnp.dot(h_c, w_hr_ref[...], preferred_element_type=jnp.float32)
    gh_z = jnp.dot(h_c, w_hz_ref[...], preferred_element_type=jnp.float32)
    gh_n = jnp.dot(h_c, w_hn_ref[...], preferred_element_type=jnp.float32)

    hnew_ref[...] = _gru_finish(x, h, gh_r, gh_z, gh_n,
                                w_ir_ref, w_iz_ref, w_in_ref,
                                b_r_ref, b_z_ref, b_in_ref, b_hn_ref)


# ----------------------------------------------------------------------------
# Kernel 1b: large embedding table (HBM) -> per-row DMA gather + GRU.
# The hidden-path matmuls are overlapped with the gather DMAs.
# ----------------------------------------------------------------------------
def _embed_gru_dma_kernel(tok_ref,        # SMEM (B,) int32 token ids
                          emb_hbm,        # HBM  (V, E) embedding table (pl.ANY)
                          h_ref,          # VMEM (B, H) previous hidden (f32)
                          w_ir_ref, w_iz_ref, w_in_ref,
                          w_hr_ref, w_hz_ref, w_hn_ref,
                          b_r_ref, b_z_ref, b_in_ref, b_hn_ref,
                          hnew_ref,       # VMEM (B, H) out (aliased with h)
                          x_buf,          # VMEM (B, E) scratch (compute dtype)
                          dma_sems):      # DMA sems (B,)
    B = h_ref.shape[0]
    V = emb_hbm.shape[0]

    # Start one row DMA per batch element; table stays in HBM.
    copies = []
    for i in range(B):
        t = jnp.clip(tok_ref[i], 0, V - 1)   # DMA/VMEM reads are unchecked
        cp = pltpu.make_async_copy(emb_hbm.at[t], x_buf.at[i], dma_sems.at[i])
        cp.start()
        copies.append(cp)

    # Hidden-path matmuls depend only on h -> hide the gather behind them.
    h = h_ref[...]
    h_c = h.astype(w_hr_ref.dtype)
    gh_r = jnp.dot(h_c, w_hr_ref[...], preferred_element_type=jnp.float32)
    gh_z = jnp.dot(h_c, w_hz_ref[...], preferred_element_type=jnp.float32)
    gh_n = jnp.dot(h_c, w_hn_ref[...], preferred_element_type=jnp.float32)

    for cp in copies:
        cp.wait()
    x = x_buf[...]

    hnew_ref[...] = _gru_finish(x, h, gh_r, gh_z, gh_n,
                                w_ir_ref, w_iz_ref, w_in_ref,
                                b_r_ref, b_z_ref, b_in_ref, b_hn_ref)


# ----------------------------------------------------------------------------
# Kernel 2: vocab projection, bf16 weight tiles streamed over a parallel grid.
# ----------------------------------------------------------------------------
def _vocab_proj_kernel(h_ref,        # VMEM (B, H)       resident across tiles
                       w_ref,        # VMEM (H, TILE_V)  streamed weight tile
                       b_ref,        # VMEM (1, TILE_V)  f32 bias tile
                       pred_ref):    # VMEM (B, TILE_V)  f32 out
    h = h_ref[...].astype(w_ref.dtype)
    pred_ref[...] = (jnp.dot(h, w_ref[...],
                             preferred_element_type=jnp.float32) + b_ref[...])


# ----------------------------------------------------------------------------
# Parameters (PyTorch layout) and one-time kernel-side preparation.
# ----------------------------------------------------------------------------
def make_params(key, vocab_size, emb_size, hidden_size):
    ks = jax.random.split(key, 7)
    bound = 1.0 / jnp.sqrt(hidden_size)
    return {
        "embedding": jax.random.normal(ks[0], (vocab_size, emb_size), jnp.float32),
        "w_ih": jax.random.uniform(ks[1], (3 * hidden_size, emb_size),
                                   jnp.float32, -bound, bound),
        "w_hh": jax.random.uniform(ks[2], (3 * hidden_size, hidden_size),
                                   jnp.float32, -bound, bound),
        "b_ih": jax.random.uniform(ks[3], (3 * hidden_size,),
                                   jnp.float32, -bound, bound),
        "b_hh": jax.random.uniform(ks[4], (3 * hidden_size,),
                                   jnp.float32, -bound, bound),
        "w_out": jax.random.uniform(ks[5], (vocab_size, hidden_size),
                                    jnp.float32, -bound, bound),
        "b_out": jax.random.uniform(ks[6], (vocab_size,),
                                    jnp.float32, -bound, bound),
    }


def prepare_decoder_params(params, compute_dtype=jnp.bfloat16):
    """One-time prep (outside the decode step): split gates, transpose, fold
    the r/z biases, cast streamed weights to bf16, pad V to a tile multiple."""
    cd = jnp.dtype(compute_dtype)
    H = params["w_hh"].shape[1]
    V = params["w_out"].shape[0]
    w_ih, w_hh = params["w_ih"], params["w_hh"]           # (3H, E), (3H, H)
    b_ih, b_hh = params["b_ih"], params["b_hh"]

    tile_v = _pick_vocab_tile(V, H, cd.itemsize)
    v_pad = pl.cdiv(V, tile_v) * tile_v
    w_out_t = jnp.pad(params["w_out"].T.astype(cd), ((0, 0), (0, v_pad - V)))
    b_out = jnp.pad(params["b_out"].astype(jnp.float32),
                    (0, v_pad - V)).reshape(1, v_pad)

    f32 = jnp.float32
    return {
        "embedding": params["embedding"].astype(cd),       # (V, E)
        "w_ir_t": w_ih[0:H].T.astype(cd),
        "w_iz_t": w_ih[H:2 * H].T.astype(cd),
        "w_in_t": w_ih[2 * H:3 * H].T.astype(cd),           # (E, H) each
        "w_hr_t": w_hh[0:H].T.astype(cd),
        "w_hz_t": w_hh[H:2 * H].T.astype(cd),
        "w_hn_t": w_hh[2 * H:3 * H].T.astype(cd),            # (H, H) each
        "b_r": (b_ih[0:H] + b_hh[0:H]).astype(f32).reshape(1, H),
        "b_z": (b_ih[H:2 * H] + b_hh[H:2 * H]).astype(f32).reshape(1, H),
        "b_in": b_ih[2 * H:3 * H].astype(f32).reshape(1, H),
        "b_hn": b_hh[2 * H:3 * H].astype(f32).reshape(1, H),
        "w_out_t": w_out_t,                                   # (H, V_pad) bf16
        "b_out": b_out,                                       # (1, V_pad) f32
    }


# ----------------------------------------------------------------------------
# Forward (mirrors DecoderRNN.forward)
# ----------------------------------------------------------------------------
@jax.jit
def decoder_rnn_forward(kparams, input_token, hidden):
    """input_token: (B,) int32; hidden: (1, B, H) f32
       -> (pred (B, V) f32, hidden (1, B, H) f32)."""
    B = input_token.shape[0]
    V, E = kparams["embedding"].shape
    H = kparams["w_hr_t"].shape[0]
    V_pad = kparams["w_out_t"].shape[1]
    cd = kparams["w_out_t"].dtype
    wb = jnp.dtype(cd).itemsize

    B_pad = ((B + 7) // 8) * 8                        # sublane-align the batch
    tok = jnp.pad(input_token.astype(jnp.int32), (0, B_pad - B))
    h0 = jnp.pad(hidden[0].astype(jnp.float32), ((0, B_pad - B), (0, 0)))

    vmem = pl.BlockSpec(memory_space=pltpu.MemorySpace.VMEM)
    smem = pl.BlockSpec(memory_space=pltpu.MemorySpace.SMEM)
    hbm = pl.BlockSpec(memory_space=pl.ANY)

    weight_args = (kparams["w_ir_t"], kparams["w_iz_t"], kparams["w_in_t"],
                   kparams["w_hr_t"], kparams["w_hz_t"], kparams["w_hn_t"],
                   kparams["b_r"], kparams["b_z"],
                   kparams["b_in"], kparams["b_hn"])

    emb_bytes = V * E * wb
    emb_in_vmem = emb_bytes <= _EMB_VMEM_MAX_BYTES
    gru_bytes = ((3 * E * H + 3 * H * H) * wb          # six gate weights
                 + 4 * H * 4                           # biases (f32)
                 + 2 * B_pad * H * 4                   # h in / h out
                 + B_pad * E * wb)                     # gathered x
    if emb_in_vmem:
        gru_bytes += emb_bytes + B_pad * V * wb        # table + one-hot temp

    gru_cp = pltpu.CompilerParams(vmem_limit_bytes=_vmem_limit(gru_bytes))

    # --- embedding gather + single GRU step ---------------------------------
    if emb_in_vmem:
        h_new = pl.pallas_call(
            _embed_gru_vmem_kernel,
            out_shape=jax.ShapeDtypeStruct((B_pad, H), jnp.float32),
            in_specs=[vmem] * 13,
            out_specs=vmem,
            input_output_aliases={2: 0},               # reuse h0 buffer
            compiler_params=gru_cp,
        )(tok.reshape(B_pad, 1), kparams["embedding"], h0, *weight_args)
    else:
        h_new = pl.pallas_call(
            _embed_gru_dma_kernel,
            out_shape=jax.ShapeDtypeStruct((B_pad, H), jnp.float32),
            in_specs=[smem, hbm] + [vmem] * 11,
            out_specs=vmem,
            scratch_shapes=[pltpu.VMEM((B_pad, E), kparams["embedding"].dtype),
                            pltpu.SemaphoreType.DMA((B_pad,))],
            input_output_aliases={2: 0},               # reuse h0 buffer
            compiler_params=gru_cp,
        )(tok, kparams["embedding"], h0, *weight_args)

    # --- vocab projection: streamed bf16 weight tiles, parallel over vocab ---
    tile_v = _pick_vocab_tile(V_pad, H, wb)
    while V_pad % tile_v:                              # guard: must divide V_pad
        tile_v //= 2
    tile_v = max(tile_v, 128)
    num_tiles = V_pad // tile_v

    vproj_bytes = (2 * H * tile_v * wb                 # weight double-buffer
                   + 2 * B_pad * tile_v * 4            # output double-buffer
                   + 2 * tile_v * 4                    # bias double-buffer
                   + 2 * B_pad * H * 4)                # resident h
    pred = pl.pallas_call(
        _vocab_proj_kernel,
        out_shape=jax.ShapeDtypeStruct((B_pad, V_pad), jnp.float32),
        grid=(num_tiles,),
        in_specs=[pl.BlockSpec((B_pad, H), lambda j: (0, 0)),     # resident
                  pl.BlockSpec((H, tile_v), lambda j: (0, j)),    # streamed
                  pl.BlockSpec((1, tile_v), lambda j: (0, j))],
        out_specs=pl.BlockSpec((B_pad, tile_v), lambda j: (0, j)),
        compiler_params=pltpu.CompilerParams(
            dimension_semantics=("parallel",),
            vmem_limit_bytes=_vmem_limit(vproj_bytes)),
    )(h_new, kparams["w_out_t"], kparams["b_out"])

    return pred[:B, :V], h_new[:B][None]               # hidden back to (1,B,H)


# ----------------------------------------------------------------------------
# Pure-JAX reference (PyTorch semantics).  With compute_dtype=bf16 it applies
# the same weight/activation casts as the kernels (f32 accumulation).
# ----------------------------------------------------------------------------
def decoder_rnn_reference(params, input_token, hidden,
                          compute_dtype=jnp.float32):
    cd = jnp.dtype(compute_dtype)
    H = params["w_hh"].shape[1]
    x = params["embedding"].astype(cd)[input_token]            # (B, E)
    h = hidden[0].astype(jnp.float32)                          # (B, H)
    gi = jnp.dot(x, params["w_ih"].astype(cd).T,
                 preferred_element_type=jnp.float32) + params["b_ih"]
    gh = jnp.dot(h.astype(cd), params["w_hh"].astype(cd).T,
                 preferred_element_type=jnp.float32) + params["b_hh"]
    r = jax.nn.sigmoid(gi[:, 0:H] + gh[:, 0:H])
    z = jax.nn.sigmoid(gi[:, H:2 * H] + gh[:, H:2 * H])
    n = jnp.tanh(gi[:, 2 * H:3 * H] + r * gh[:, 2 * H:3 * H])
    h_new = (1.0 - z) * n + z * h
    pred = jnp.dot(h_new.astype(cd), params["w_out"].astype(cd).T,
                   preferred_element_type=jnp.float32) + params["b_out"]
    return pred, h_new[None]


if __name__ == "__main__":
    VOCAB, EMB, HIDDEN, BATCH = 32, 16, 32, 4

    key = jax.random.PRNGKey(0)
    pkey, tkey, hkey = jax.random.split(key, 3)

    params = make_params(pkey, VOCAB, EMB, HIDDEN)
    kparams = prepare_decoder_params(params)           # once, outside the step
    input_token = jax.random.randint(tkey, (BATCH,), 0, VOCAB, dtype=jnp.int32)
    hidden = jax.random.normal(hkey, (1, BATCH, HIDDEN), jnp.float32)

    pred, h_out = decoder_rnn_forward(kparams, input_token, hidden)
    pred = jax.block_until_ready(pred)
    h_out = jax.block_until_ready(h_out)
    assert pred.shape == (BATCH, VOCAB) and h_out.shape == (1, BATCH, HIDDEN)

    # Tight check vs. a reference applying the same bf16 casts (kernel logic).
    pred_m, h_m = decoder_rnn_reference(params, input_token, hidden, jnp.bfloat16)
    assert jnp.allclose(pred, pred_m, atol=2e-3, rtol=2e-3)
    assert jnp.allclose(h_out, h_m, atol=2e-3, rtol=2e-3)

    # Loose check vs. exact PyTorch f32 semantics (bf16 quantization only).
    pred_f, h_f = decoder_rnn_reference(params, input_token, hidden, jnp.float32)
    assert jnp.allclose(pred, pred_f, atol=1e-1, rtol=1e-1)
    assert jnp.allclose(h_out, h_f, atol=1e-1, rtol=1e-1)

    print("KERNEL_OK")
</pallas_src>

<mosaic_0001>
module attributes {stable_mosaic.version = 11 : i64} {
  func.func @_vocab_proj_kernel(%arg0: i32, %arg1: memref<8x32xf32, #tpu.memory_space<vmem>>, %arg2: memref<32x128xbf16, #tpu.memory_space<vmem>>, %arg3: memref<1x128xf32, #tpu.memory_space<vmem>>, %arg4: memref<8x128xf32, #tpu.memory_space<vmem>>) attributes {dimension_semantics = [#tpu.dimension_semantics<parallel>], iteration_bounds = array<i64: 1>, scalar_prefetch = 0 : i64, scratch_operands = 0 : i64, tpu.core_type = #tpu.core_type<tc>, window_params = [{pipeline_mode = #tpu.pipeline_mode<synchronous>, transform_indices = @transform_0, window_bounds = array<i64: 8, 32>}, {transform_indices = @transform_1, window_bounds = array<i64: 32, 128>}, {transform_indices = @transform_2, window_bounds = array<i64: 1, 128>}, {transform_indices = @transform_3, window_bounds = array<i64: 8, 128>}]} {
    %c0 = arith.constant 0 : index
    %c0_0 = arith.constant 0 : index
    %0 = vector.load %arg1[%c0, %c0_0] : memref<8x32xf32, #tpu.memory_space<vmem>>, vector<8x32xf32>
    %1 = arith.truncf %0 : vector<8x32xf32> to vector<8x32xbf16>
    %c0_1 = arith.constant 0 : index
    %c0_2 = arith.constant 0 : index
    %2 = vector.load %arg2[%c0_1, %c0_2] : memref<32x128xbf16, #tpu.memory_space<vmem>>, vector<32x128xbf16>
    %cst = arith.constant dense<0.000000e+00> : vector<8x128xf32>
    %3 = tpu.matmul %1, %2, %cst {dimension_numbers = #tpu.dot_dimension_numbers<[1], [0], [0], [1], [0, 0, 1, 1], [], []>} : vector<8x32xbf16>, vector<32x128xbf16>, vector<8x128xf32> -> vector<8x128xf32>
    %c0_3 = arith.constant 0 : index
    %c0_4 = arith.constant 0 : index
    %4 = vector.load %arg3[%c0_3, %c0_4] : memref<1x128xf32, #tpu.memory_space<vmem>>, vector<1x128xf32>
    %5 = vector.broadcast %4 : vector<1x128xf32> to vector<8x128xf32>
    %6 = arith.addf %3, %5 : vector<8x128xf32>
    %c0_5 = arith.constant 0 : index
    %c0_6 = arith.constant 0 : index
    %7 = vector.load %arg4[%c0_5, %c0_6] : memref<8x128xf32, #tpu.memory_space<vmem>>, vector<8x128xf32>
    tpu.vector_store %arg4[%c0_5, %c0_6], %6 {strides = array<i32>} : memref<8x128xf32, #tpu.memory_space<vmem>>, vector<8x128xf32>,
    return
  }
  func.func @transform_0(%arg0: i32) -> (i32, i32) {
    %c0_i32 = arith.constant 0 : i32
    %c0_i32_0 = arith.constant 0 : i32
    %c0_i32_1 = arith.constant 0 : i32
    return %c0_i32, %c0_i32_0 : i32, i32
  }
  func.func @transform_1(%arg0: i32) -> (i32, i32) {
    %c0_i32 = arith.constant 0 : i32
    %c0_i32_0 = arith.constant 0 : i32
    return %c0_i32, %arg0 : i32, i32
  }
  func.func @transform_2(%arg0: i32) -> (i32, i32) {
    %c0_i32 = arith.constant 0 : i32
    %c0_i32_0 = arith.constant 0 : i32
    return %c0_i32, %arg0 : i32, i32
  }
  func.func @transform_3(%arg0: i32) -> (i32, i32) {
    %c0_i32 = arith.constant 0 : i32
    %c0_i32_0 = arith.constant 0 : i32
    return %c0_i32, %arg0 : i32, i32
  }
}

module attributes {stable_mosaic.version = 11 : i64} {
  func.func @_embed_gru_vmem_kernel(%arg0: memref<8x1xi32, #tpu.memory_space<vmem>>, %arg1: memref<32x16xbf16, #tpu.memory_space<vmem>>, %arg2: memref<8x32xf32, #tpu.memory_space<vmem>>, %arg3: memref<16x32xbf16, #tpu.memory_space<vmem>>, %arg4: memref<16x32xbf16, #tpu.memory_space<vmem>>, %arg5: memref<16x32xbf16, #tpu.memory_space<vmem>>, %arg6: memref<32x32xbf16, #tpu.memory_space<vmem>>, %arg7: memref<32x32xbf16, #tpu.memory_space<vmem>>, %arg8: memref<32x32xbf16, #tpu.memory_space<vmem>>, %arg9: memref<1x32xf32, #tpu.memory_space<vmem>>, %arg10: memref<1x32xf32, #tpu.memory_space<vmem>>, %arg11: memref<1x32xf32, #tpu.memory_space<vmem>>, %arg12: memref<1x32xf32, #tpu.memory_space<vmem>>, %arg13: memref<8x32xf32, #tpu.memory_space<vmem>>) attributes {dimension_semantics = [], scalar_prefetch = 0 : i64, scratch_operands = 0 : i64, tpu.core_type = #tpu.core_type<tc>} {
    %c0 = arith.constant 0 : index
    %c0_0 = arith.constant 0 : index
    %0 = vector.load %arg0[%c0, %c0_0] : memref<8x1xi32, #tpu.memory_space<vmem>>, vector<8x1xi32>
    %1 = tpu.iota {dimensions = array<i32: 1>} : vector<8x32xi32>
    %2 = vector.broadcast %0 : vector<8x1xi32> to vector<8x32xi32>
    %3 = arith.cmpi eq, %1, %2 : vector<8x32xi32>
    %4 = arith.extui %3 : vector<8x32xi1> to vector<8x32xi32>
    %5 = arith.sitofp %4 : vector<8x32xi32> to vector<8x32xf32>
    %6 = arith.truncf %5 : vector<8x32xf32> to vector<8x32xbf16>
    %c0_1 = arith.constant 0 : index
    %c0_2 = arith.constant 0 : index
    %7 = vector.load %arg1[%c0_1, %c0_2] : memref<32x16xbf16, #tpu.memory_space<vmem>>, vector<32x16xbf16>
    %cst = arith.constant dense<0.000000e+00> : vector<8x16xf32>
    %8 = tpu.matmul %6, %7, %cst {dimension_numbers = #tpu.dot_dimension_numbers<[1], [0], [0], [1], [0, 0, 1, 1], [], []>} : vector<8x32xbf16>, vector<32x16xbf16>, vector<8x16xf32> -> vector<8x16xf32>
    %9 = arith.truncf %8 : vector<8x16xf32> to vector<8x16xbf16>
    %c0_3 = arith.constant 0 : index
    %c0_4 = arith.constant 0 : index
    %10 = vector.load %arg2[%c0_3, %c0_4] : memref<8x32xf32, #tpu.memory_space<vmem>>, vector<8x32xf32>
    %11 = arith.truncf %10 : vector<8x32xf32> to vector<8x32xbf16>
    %c0_5 = arith.constant 0 : index
    %c0_6 = arith.constant 0 : index
    %12 = vector.load %arg6[%c0_5, %c0_6] : memref<32x32xbf16, #tpu.memory_space<vmem>>, vector<32x32xbf16>
    %cst_7 = arith.constant dense<0.000000e+00> : vector<8x32xf32>
    %13 = tpu.matmul %11, %12, %cst_7 {dimension_numbers = #tpu.dot_dimension_numbers<[1], [0], [0], [1], [0, 0, 1, 1], [], []>} : vector<8x32xbf16>, vector<32x32xbf16>, vector<8x32xf32> -> vector<8x32xf32>
    %c0_8 = arith.constant 0 : index
    %c0_9 = arith.constant 0 : index
    %14 = vector.load %arg7[%c0_8, %c0_9] : memref<32x32xbf16, #tpu.memory_space<vmem>>, vector<32x32xbf16>
    %cst_10 = arith.constant dense<0.000000e+00> : vector<8x32xf32>
    %15 = tpu.matmul %11, %14, %cst_10 {dimension_numbers = #tpu.dot_dimension_numbers<[1], [0], [0], [1], [0, 0, 1, 1], [], []>} : vector<8x32xbf16>, vector<32x32xbf16>, vector<8x32xf32> -> vector<8x32xf32>
    %c0_11 = arith.constant 0 : index
    %c0_12 = arith.constant 0 : index
    %16 = vector.load %arg8[%c0_11, %c0_12] : memref<32x32xbf16, #tpu.memory_space<vmem>>, vector<32x32xbf16>
    %cst_13 = arith.constant dense<0.000000e+00> : vector<8x32xf32>
    %17 = tpu.matmul %11, %16, %cst_13 {dimension_numbers = #tpu.dot_dimension_numbers<[1], [0], [0], [1], [0, 0, 1, 1], [], []>} : vector<8x32xbf16>, vector<32x32xbf16>, vector<8x32xf32> -> vector<8x32xf32>
    %c0_14 = arith.constant 0 : index
    %c0_15 = arith.constant 0 : index
    %18 = vector.load %arg3[%c0_14, %c0_15] : memref<16x32xbf16, #tpu.memory_space<vmem>>, vector<16x32xbf16>
    %cst_16 = arith.constant dense<0.000000e+00> : vector<8x32xf32>
    %19 = tpu.matmul %9, %18, %cst_16 {dimension_numbers = #tpu.dot_dimension_numbers<[1], [0], [0], [1], [0, 0, 1, 1], [], []>} : vector<8x16xbf16>, vector<16x32xbf16>, vector<8x32xf32> -> vector<8x32xf32>
    %c0_17 = arith.constant 0 : index
    %c0_18 = arith.constant 0 : index
    %20 = vector.load %arg4[%c0_17, %c0_18] : memref<16x32xbf16, #tpu.memory_space<vmem>>, vector<16x32xbf16>
    %cst_19 = arith.constant dense<0.000000e+00> : vector<8x32xf32>
    %21 = tpu.matmul %9, %20, %cst_19 {dimension_numbers = #tpu.dot_dimension_numbers<[1], [0], [0], [1], [0, 0, 1, 1], [], []>} : vector<8x16xbf16>, vector<16x32xbf16>, vector<8x32xf32> -> vector<8x32xf32>
    %c0_20 = arith.constant 0 : index
    %c0_21 = arith.constant 0 : index
    %22 = vector.load %arg5[%c0_20, %c0_21] : memref<16x32xbf16, #tpu.memory_space<vmem>>, vector<16x32xbf16>
    %cst_22 = arith.constant dense<0.000000e+00> : vector<8x32xf32>
    %23 = tpu.matmul %9, %22, %cst_22 {dimension_numbers = #tpu.dot_dimension_numbers<[1], [0], [0], [1], [0, 0, 1, 1], [], []>} : vector<8x16xbf16>, vector<16x32xbf16>, vector<8x32xf32> -> vector<8x32xf32>
    %24 = arith.addf %19, %13 : vector<8x32xf32>
    %c0_23 = arith.constant 0 : index
    %c0_24 = arith.constant 0 : index
    %25 = vector.load %arg9[%c0_23, %c0_24] : memref<1x32xf32, #tpu.memory_space<vmem>>, vector<1x32xf32>
    %26 = vector.broadcast %25 : vector<1x32xf32> to vector<8x32xf32>
    %27 = arith.addf %24, %26 : vector<8x32xf32>
    %28 = arith.negf %27 : vector<8x32xf32>
    %29 = math.exp %28 : vector<8x32xf32>
    %cst_25 = arith.constant 1.000000e+00 : f32
    %30 = vector.broadcast %cst_25 : f32 to vector<8x32xf32>
    %31 = arith.addf %30, %29 : vector<8x32xf32>
    %32 = arith.divf %30, %31 : vector<8x32xf32>
    %33 = arith.addf %21, %15 : vector<8x32xf32>
    %c0_26 = arith.constant 0 : index
    %c0_27 = arith.constant 0 : index
    %34 = vector.load %arg10[%c0_26, %c0_27] : memref<1x32xf32, #tpu.memory_space<vmem>>, vector<1x32xf32>
    %35 = vector.broadcast %34 : vector<1x32xf32> to vector<8x32xf32>
    %36 = arith.addf %33, %35 : vector<8x32xf32>
    %37 = arith.negf %36 : vector<8x32xf32>
    %38 = math.exp %37 : vector<8x32xf32>
    %cst_28 = arith.constant 1.000000e+00 : f32
    %39 = vector.broadcast %cst_28 : f32 to vector<8x32xf32>
    %40 = arith.addf %39, %38 : vector<8x32xf32>
    %41 = arith.divf %39, %40 : vector<8x32xf32>
    %c0_29 = arith.constant 0 : index
    %c0_30 = arith.constant 0 : index
    %42 = vector.load %arg11[%c0_29, %c0_30] : memref<1x32xf32, #tpu.memory_space<vmem>>, vector<1x32xf32>
    %43 = vector.broadcast %42 : vector<1x32xf32> to vector<8x32xf32>
    %44 = arith.addf %23, %43 : vector<8x32xf32>
    %c0_31 = arith.constant 0 : index
    %c0_32 = arith.constant 0 : index
    %45 = vector.load %arg12[%c0_31, %c0_32] : memref<1x32xf32, #tpu.memory_space<vmem>>, vector<1x32xf32>
    %46 = vector.broadcast %45 : vector<1x32xf32> to vector<8x32xf32>
    %47 = arith.addf %17, %46 : vector<8x32xf32>
    %48 = arith.mulf %32, %47 : vector<8x32xf32>
    %49 = arith.addf %44, %48 : vector<8x32xf32>
    %50 = math.tanh %49 : vector<8x32xf32>
    %cst_33 = arith.constant 1.000000e+00 : f32
    %51 = vector.broadcast %cst_33 : f32 to vector<8x32xf32>
    %52 = arith.subf %51, %41 : vector<8x32xf32>
    %53 = arith.mulf %52, %50 : vector<8x32xf32>
    %54 = arith.mulf %41, %10 : vector<8x32xf32>
    %55 = arith.addf %53, %54 : vector<8x32xf32>
    %c0_34 = arith.constant 0 : index
    %c0_35 = arith.constant 0 : index
    %56 = vector.load %arg13[%c0_34, %c0_35] : memref<8x32xf32, #tpu.memory_space<vmem>>, vector<8x32xf32>
    tpu.vector_store %arg13[%c0_34, %c0_35], %55 {strides = array<i32>} : memref<8x32xf32, #tpu.memory_space<vmem>>, vector<8x32xf32>,
    return
  }
}

</mosaic_0001>

<llo_original>
// kernel: decoder_rnn_forward.3
$region0: #{decoder_rnn_forward.3}
  #allocation0 [shape = 'u32[]', space=smem, size = 0x4, offset = 0x4, fixed_abs, tag = 'smem constant byte address 0x4 - core index']
  #allocation1 [shape = 'u32[144,128]{1,0:T(1,128)}', space=vmem, size = 0x12000, scoped, tag = 'internal scratch']
  %s0 = inlined_call_operand.vmem [shape: f32[8,32], index: 0, kind: input, shape index: {}]
  %s1 = inlined_call_operand.vmem [shape: bf16[32,128], index: 1, kind: input, shape index: {}]
  %s2 = inlined_call_operand.vmem [shape: f32[1,128], index: 2, kind: input, shape index: {}]
  %s3 = inlined_call_operand.vmem [shape: f32[8,128], index: 3, kind: output, shape index: {}]
  %s4 = sld [smem:[#allocation0]]
  $region22: #{decoder_rnn_forward.3} parent=0
    _
  %s6 = ssub.s32 1, %s4
  %s7 = scalar_select 0, %s6, %s4
  // Predicated region
  $region2: #{decoder_rnn_forward.3} parent=0 // pred_check
    _
  $region3: #{decoder_rnn_forward.3} parent=0 // pred_check_branch
    %9 = sbr.rel (0) target = $region5
  $region4: #{decoder_rnn_forward.3} parent=0 // pred_region
    _
  $region5: #{decoder_rnn_forward.3} parent=0 // pred_fallthru
    _
  // Predicated region
  $region6: #{decoder_rnn_forward.3} parent=0 // pred_check
    _
  $region7: #{decoder_rnn_forward.3} parent=0 // pred_check_branch
    %11 = sbr.rel (0) target = $region9
  $region8: #{decoder_rnn_forward.3} parent=0 // pred_region
    _
  $region9: #{decoder_rnn_forward.3} parent=0 // pred_fallthru
    _
  // Predicated region
  $region10: #{decoder_rnn_forward.3} parent=0 // pred_check
    _
  $region11: #{decoder_rnn_forward.3} parent=0 // pred_check_branch
    %13 = sbr.rel (0) target = $region13
  $region12: #{decoder_rnn_forward.3} parent=0 // pred_region
    _
  $region13: #{decoder_rnn_forward.3} parent=0 // pred_fallthru
    _
  %v15 = vld [vmem:[%s0] sm:$0xff]
  %v16 = vpack.c.bf16 %v15, %v15
  %v17 = vld [vmem:[%s1] sm:$0xf]
  %v18 = vld [vmem:[%s1 + $0x4] sm:$0xf]
  %v19 = vld [vmem:[%s1 + $0x8] sm:$0xf]
  %v20 = vld [vmem:[%s1 + $0xc] sm:$0xf]
  %v21 = vld [vmem:[%s2] sm:$0x1]
  %v23 = vlaneseq
  %v24 = vshrl.u32 %v23, 7
  %v25 = vsub.s32 0, %v24
  %v26 = vrot.slane %v21, %v25
  %v32 = vunpack.c.l.b16 %v17
  %v33 = vunpack.c.l.b16 %v18
  %v34 = vunpack.c.l.b16 %v19
  %v35 = vunpack.c.l.b16 %v20
  %v36 = vpack.c.b16 %v33, %v32
  %v37 = vpack.c.b16 %v35, %v34
  %vm40 = vcmask 261120
  %v42 = vsel %vm40, %v16, 0
  %44 = vmatprep.subr.bf16.mxu0 0
  %45 = vmatpush1.bf16.msra.mxu0 %v36
  %46 = vmatprep.subr.bf16.mxu0 0
  %47 = vmatpush1.bf16.msra.mxu0 %v37
  %48 = vmatprep.subr.bf16.mxu0 0
  %49 = vmatpush1.bf16.msra.mxu0 0
  %50 = vmatprep.subr.bf16.mxu0 0
  %51 = vmatpush1.bf16.msra.mxu0 0
  %52 = vmatprep.subr.bf16.mxu0 0
  %53 = vmatpush1.bf16.msra.mxu0 0
  %54 = vmatprep.subr.bf16.mxu0 0
  %55 = vmatpush1.bf16.msra.mxu0 0
  %56 = vmatprep.subr.bf16.mxu0 0
  %57 = vmatpush1.bf16.msra.mxu0 0
  %58 = vmatprep.subr.bf16.mxu0 0
  %59 = vmatpush1.bf16.msra.mxu0 0
  %60 = vmatprep.subr.bf16.mxu0 0
  %61 = vmatpush1.bf16.msra.mxu0 0
  %62 = vmatprep.subr.bf16.mxu0 0
  %63 = vmatpush1.bf16.msra.mxu0 0
  %64 = vmatprep.subr.bf16.mxu0 0
  %65 = vmatpush1.bf16.msra.mxu0 0
  %66 = vmatprep.subr.bf16.mxu0 0
  %67 = vmatpush1.bf16.msra.mxu0 0
  %68 = vmatprep.subr.bf16.mxu0 0
  %69 = vmatpush1.bf16.msra.mxu0 0
  %70 = vmatprep.subr.bf16.mxu0 0
  %71 = vmatpush1.bf16.msra.mxu0 0
  %72 = vmatprep.subr.bf16.mxu0 0
  %73 = vmatpush1.bf16.msra.mxu0 0
  %74 = vmatprep.subr.bf16.mxu0 0
  %75 = vmatpush1.bf16.msra.mxu0 0
  %76 = vmatprep.mubr.bf16.mxu0 0
  %77 = vmatmul.mubr.bf16.gmra.mrb[0].mxu0 %v42
  %v78 = vpop.f32.mrb[0].mxu0
  %v79 = vadd.f32 %v26, %v78
  %v80 = vpop.f32.mrb[0].mxu0
  %v81 = vpop.f32.mrb[0].mxu0
  %v82 = vpop.f32.mrb[0].mxu0
  %83 = vdwg.mxu0
  %84 = vst [vmem:[%s3] sm:$0xff] %v79
  // Predicated region
  $region14: #{decoder_rnn_forward.3} parent=0 // pred_check
    _
  $region15: #{decoder_rnn_forward.3} parent=0 // pred_check_branch
    %86 = sbr.rel (0) target = $region17
  $region16: #{decoder_rnn_forward.3} parent=0 // pred_region
    _
  $region17: #{decoder_rnn_forward.3} parent=0 // pred_fallthru
    _
  // Predicated region
  $region18: #{decoder_rnn_forward.3} parent=0 // pred_check
    _
  $region19: #{decoder_rnn_forward.3} parent=0 // pred_check_branch
    %88 = sbr.rel (0) target = $region21
  $region20: #{decoder_rnn_forward.3} parent=0 // pred_region
    _
  $region21: #{decoder_rnn_forward.3} parent=0 // pred_fallthru
    _

// kernel: decoder_rnn_forward.2
$region0: #{decoder_rnn_forward.2}
  #allocation0 [shape = 'u32[]', space=smem, size = 0x4, offset = 0x4, fixed_abs, tag = 'smem constant byte address 0x4 - core index']
  #allocation1 [shape = 'u32[144,128]{1,0:T(1,128)}', space=vmem, size = 0x12000, scoped, tag = 'internal scratch']
  %s0 = inlined_call_operand.vmem [shape: s32[8,1], index: 0, kind: input, shape index: {}]
  %s1 = inlined_call_operand.vmem [shape: bf16[32,16], index: 1, kind: input, shape index: {}]
  %s2 = inlined_call_operand.vmem [shape: f32[8,32], index: 2, kind: input, shape index: {}, may-alias: {2,13}]
  %s3 = inlined_call_operand.vmem [shape: bf16[16,32], index: 3, kind: input, shape index: {}]
  %s4 = inlined_call_operand.vmem [shape: bf16[16,32], index: 4, kind: input, shape index: {}]
  %s5 = inlined_call_operand.vmem [shape: bf16[16,32], index: 5, kind: input, shape index: {}]
  %s6 = inlined_call_operand.vmem [shape: bf16[32,32], index: 6, kind: input, shape index: {}]
  %s7 = inlined_call_operand.vmem [shape: bf16[32,32], index: 7, kind: input, shape index: {}]
  %s8 = inlined_call_operand.vmem [shape: bf16[32,32], index: 8, kind: input, shape index: {}]
  %s9 = inlined_call_operand.hbm [shape: f32[1,32], index: 9, kind: input, shape index: {}]
  %s10 = inlined_call_operand.hbm [shape: f32[1,32], index: 10, kind: input, shape index: {}]
  %s11 = inlined_call_operand.hbm [shape: f32[1,32], index: 11, kind: input, shape index: {}]
  %s12 = inlined_call_operand.hbm [shape: f32[1,32], index: 12, kind: input, shape index: {}]
  %s13 = inlined_call_operand.vmem [shape: f32[8,32], index: 13, kind: output, shape index: {}, may-alias: {2,13}]
  %s14 = sld [smem:[#allocation0]]
  $region78: #{decoder_rnn_forward.2} parent=0
    _
  %s16 = ssub.s32 1, %s14
  %s17 = scalar_select 0, %s16, %s14
  $region1: #{decoder_rnn_forward.2} parent=0
    #allocation2 [shape = 'u8[512]{0}', space=vmem, size = 0x400, scoped, tag = 'input window, operand 9, single buffered']
    #allocation3 [shape = 's32[1]{0}', space=sflag, size = 0x4, scoped, tag = 'scoped memory for decoder_rnn_forward.2']
    #allocation4 [shape = 'u8[512]{0}', space=vmem, size = 0x400, scoped, tag = 'input window, operand 10, single buffered']
    #allocation5 [shape = 's32[1]{0}', space=sflag, size = 0x4, scoped, tag = 'scoped memory for decoder_rnn_forward.2']
    #allocation6 [shape = 'u8[512]{0}', space=vmem, size = 0x400, scoped, tag = 'input window, operand 11, single buffered']
    #allocation7 [shape = 'u8[512]{0}', space=vmem, size = 0x400, scoped, tag = 'input window, operand 12, single buffered']
    #allocation8 [shape = 's32[1]{0}', space=sflag, size = 0x4, scoped, tag = 'scoped memory for decoder_rnn_forward.2']
    %18 = vsyncpa [#allocation3], 0
    %19 = vsyncpa [#allocation5], 0
    %20 = vsyncpa [#allocation8], 0
    // Predicated region
    $region2: #{decoder_rnn_forward.2} parent=1 // pred_check
      _
    $region3: #{decoder_rnn_forward.2} parent=1 // pred_check_branch
      %22 = sbr.rel (0) target = $region5
    $region4: #{decoder_rnn_forward.2} parent=1 // pred_region
      _
    $region5: #{decoder_rnn_forward.2} parent=1 // pred_fallthru
      _
    // Predicated region
    $region6: #{decoder_rnn_forward.2} parent=1 // pred_check
      _
    $region7: #{decoder_rnn_forward.2} parent=1 // pred_check_branch
      %24 = sbr.rel (0) target = $region9
    $region8: #{decoder_rnn_forward.2} parent=1 // pred_region
      _
    $region9: #{decoder_rnn_forward.2} parent=1 // pred_fallthru
      _
    // Predicated region
    $region10: #{decoder_rnn_forward.2} parent=1 // pred_check
      _
    $region11: #{decoder_rnn_forward.2} parent=1 // pred_check_branch
      %26 = sbr.rel (0) target = $region13
    $region12: #{decoder_rnn_forward.2} parent=1 // pred_region
      _
    $region13: #{decoder_rnn_forward.2} parent=1 // pred_fallthru
      _
    // Predicated region
    $region14: #{decoder_rnn_forward.2} parent=1 // pred_check
      _
    $region15: #{decoder_rnn_forward.2} parent=1 // pred_check_branch
      %28 = sbr.rel (0) target = $region17
    $region16: #{decoder_rnn_forward.2} parent=1 // pred_region
      _
    $region17: #{decoder_rnn_forward.2} parent=1 // pred_fallthru
      _
    // Predicated region
    $region18: #{decoder_rnn_forward.2} parent=1 // pred_check
      _
    $region19: #{decoder_rnn_forward.2} parent=1 // pred_check_branch
      %30 = sbr.rel (0) target = $region21
    $region20: #{decoder_rnn_forward.2} parent=1 // pred_region
      _
    $region21: #{decoder_rnn_forward.2} parent=1 // pred_fallthru
      _
    // Predicated region
    $region22: #{decoder_rnn_forward.2} parent=1 // pred_check
      _
    $region23: #{decoder_rnn_forward.2} parent=1 // pred_check_branch
      %32 = sbr.rel (0) target = $region25
    $region24: #{decoder_rnn_forward.2} parent=1 // pred_region
      _
    $region25: #{decoder_rnn_forward.2} parent=1 // pred_fallthru
      _
    // Predicated region
    $region26: #{decoder_rnn_forward.2} parent=1 // pred_check
      _
    $region27: #{decoder_rnn_forward.2} parent=1 // pred_check_branch
      %34 = sbr.rel (0) target = $region29
    $region28: #{decoder_rnn_forward.2} parent=1 // pred_region
      _
    $region29: #{decoder_rnn_forward.2} parent=1 // pred_fallthru
      _
    // Predicated region
    $region30: #{decoder_rnn_forward.2} parent=1 // pred_check
      _
    $region31: #{decoder_rnn_forward.2} parent=1 // pred_check_branch
      %36 = sbr.rel (0) target = $region33
    $region32: #{decoder_rnn_forward.2} parent=1 // pred_region
      _
    $region33: #{decoder_rnn_forward.2} parent=1 // pred_fallthru
      _
    // Predicated region
    $region34: #{decoder_rnn_forward.2} parent=1 // pred_check
      _
    $region35: #{decoder_rnn_forward.2} parent=1 // pred_check_branch
      %38 = sbr.rel (0) target = $region37
    $region36: #{decoder_rnn_forward.2} parent=1 // pred_region
      _
    $region37: #{decoder_rnn_forward.2} parent=1 // pred_fallthru
      _
    // Predicated region
    $region38: #{decoder_rnn_forward.2} parent=1 // pred_check
      _
    $region39: #{decoder_rnn_forward.2} parent=1 // pred_check_branch
      %40 = sbr.rel (0) target = $region41
    $region40: #{decoder_rnn_forward.2} parent=1 // pred_region
      %s42 = ssub.s32 16, 16
      %43 = vsyncadd [#allocation3], %s42
      %s45 = sshll.u32 [#allocation2], 4
      %s46 = int_to_ptr.vmem [resolvable:$true] %s45
      %48 = dma.hbm_to_vmem [thread:$0]  %s9, 16, %s46, [#allocation3]
    $region41: #{decoder_rnn_forward.2} parent=1 // pred_fallthru
      _
    // Predicated region
    $region42: #{decoder_rnn_forward.2} parent=1 // pred_check
      _
    $region43: #{decoder_rnn_forward.2} parent=1 // pred_check_branch
      %50 = sbr.rel (0) target = $region45
    $region44: #{decoder_rnn_forward.2} parent=1 // pred_region
      %s52 = ssub.s32 16, 16
      %53 = vsyncadd [#allocation5], %s52
      %s55 = sshll.u32 [#allocation4], 4
      %s56 = int_to_ptr.vmem [resolvable:$true] %s55
      %58 = dma.hbm_to_vmem [thread:$0]  %s10, 16, %s56, [#allocation5]
    $region45: #{decoder_rnn_forward.2} parent=1 // pred_fallthru
      _
    // Predicated region
    $region46: #{decoder_rnn_forward.2} parent=1 // pred_check
      _
    $region47: #{decoder_rnn_forward.2} parent=1 // pred_check_branch
      %60 = sbr.rel (0) target = $region49
    $region48: #{decoder_rnn_forward.2} parent=1 // pred_region
      %s62 = ssub.s32 16, 16
      %63 = vsyncadd [#allocation5], %s62
      %s65 = sshll.u32 [#allocation6], 4
      %s66 = int_to_ptr.vmem [resolvable:$true] %s65
      %68 = dma.hbm_to_vmem [thread:$0]  %s11, 16, %s66, [#allocation5]
    $region49: #{decoder_rnn_forward.2} parent=1 // pred_fallthru
      _
    // Predicated region
    $region50: #{decoder_rnn_forward.2} parent=1 // pred_check
      _
    $region51: #{decoder_rnn_forward.2} parent=1 // pred_check_branch
      %70 = sbr.rel (0) target = $region53
    $region52: #{decoder_rnn_forward.2} parent=1 // pred_region
      %s72 = ssub.s32 16, 16
      %73 = vsyncadd [#allocation8], %s72
      %s75 = sshll.u32 [#allocation7], 4
      %s76 = int_to_ptr.vmem [resolvable:$true] %s75
      %78 = dma.hbm_to_vmem [thread:$0]  %s12, 16, %s76, [#allocation8]
    $region53: #{decoder_rnn_forward.2} parent=1 // pred_fallthru
      _
    // Predicated region
    $region54: #{decoder_rnn_forward.2} parent=1 // pred_check
      _
    $region55: #{decoder_rnn_forward.2} parent=1 // pred_check_branch
      %80 = sbr.rel (0) target = $region57
    $region56: #{decoder_rnn_forward.2} parent=1 // pred_region
      %81 = dma.done [#allocation3], 16
    $region57: #{decoder_rnn_forward.2} parent=1 // pred_fallthru
      _
    // Predicated region
    $region58: #{decoder_rnn_forward.2} parent=1 // pred_check
      _
    $region59: #{decoder_rnn_forward.2} parent=1 // pred_check_branch
      %83 = sbr.rel (0) target = $region61
    $region60: #{decoder_rnn_forward.2} parent=1 // pred_region
      %84 = dma.done [#allocation5], 16
    $region61: #{decoder_rnn_forward.2} parent=1 // pred_fallthru
      _
    // Predicated region
    $region62: #{decoder_rnn_forward.2} parent=1 // pred_check
      _
    $region63: #{decoder_rnn_forward.2} parent=1 // pred_check_branch
      %86 = sbr.rel (0) target = $region65
    $region64: #{decoder_rnn_forward.2} parent=1 // pred_region
      %87 = dma.done [#allocation5], 16
    $region65: #{decoder_rnn_forward.2} parent=1 // pred_fallthru
      _
    // Predicated region
    $region66: #{decoder_rnn_forward.2} parent=1 // pred_check
      _
    $region67: #{decoder_rnn_forward.2} parent=1 // pred_check_branch
      %89 = sbr.rel (0) target = $region69
    $region68: #{decoder_rnn_forward.2} parent=1 // pred_region
      %90 = dma.done [#allocation8], 16
    $region69: #{decoder_rnn_forward.2} parent=1 // pred_fallthru
      _
    %v92 = vld [vmem:[%s0] sm:$0xff]
    %v93 = vlaneseq
    %v94 = vand.u32 %v93, 127
    %95 = vset.pattern.permute.xlu0 0
    %96 = vperm.xlu0 %95, %v92
    %v97 = vpop.permute.xlu0 %96
    %vm98 = vcmp.eq.s32.totalorder %v94, %v97
    %v99 = vsel %vm98, 1, 0
    %v100 = vcvt.s32.f32 %v99
    %v101 = vpack.c.bf16 %v100, %v100
    %v102 = vld [vmem:[%s1] sm:$0xf]
    %v103 = vld [vmem:[%s1 + $0x4] sm:$0xf]
    %v104 = vld [vmem:[%s1 + $0x8] sm:$0xf]
    %v105 = vld [vmem:[%s1 + $0xc] sm:$0xf]
    %v110 = vunpack.c.l.b16 %v102
    %v111 = vunpack.c.l.b16 %v103
    %v112 = vunpack.c.l.b16 %v104
    %v113 = vunpack.c.l.b16 %v105
    %v114 = vpack.c.b16 %v111, %v110
    %v115 = vpack.c.b16 %v113, %v112
    %vm118 = vcmask 261120
    %v120 = vsel %vm118, %v101, 0
    %122 = vmatprep.subr.bf16.mxu0 0
    %123 = vmatpush1.bf16.msra.mxu0 %v114
    %124 = vmatprep.subr.bf16.mxu0 0
    %125 = vmatpush1.bf16.msra.mxu0 %v115
    %126 = vmatprep.subr.bf16.mxu0 0
    %127 = vmatpush1.bf16.msra.mxu0 0
    %128 = vmatprep.subr.bf16.mxu0 0
    %129 = vmatpush1.bf16.msra.mxu0 0
    %130 = vmatprep.subr.bf16.mxu0 0
    %131 = vmatpush1.bf16.msra.mxu0 0
    %132 = vmatprep.subr.bf16.mxu0 0
    %133 = vmatpush1.bf16.msra.mxu0 0
    %134 = vmatprep.subr.bf16.mxu0 0
    %135 = vmatpush1.bf16.msra.mxu0 0
    %136 = vmatprep.subr.bf16.mxu0 0
    %137 = vmatpush1.bf16.msra.mxu0 0
    %138 = vmatprep.subr.bf16.mxu0 0
    %139 = vmatpush1.bf16.msra.mxu0 0
    %140 = vmatprep.subr.bf16.mxu0 0
    %141 = vmatpush1.bf16.msra.mxu0 0
    %142 = vmatprep.subr.bf16.mxu0 0
    %143 = vmatpush1.bf16.msra.mxu0 0
    %144 = vmatprep.subr.bf16.mxu0 0
    %145 = vmatpush1.bf16.msra.mxu0 0
    %146 = vmatprep.subr.bf16.mxu0 0
    %147 = vmatpush1.bf16.msra.mxu0 0
    %148 = vmatprep.subr.bf16.mxu0 0
    %149 = vmatpush1.bf16.msra.mxu0 0
    %150 = vmatprep.subr.bf16.mxu0 0
    %151 = vmatpush1.bf16.msra.mxu0 0
    %152 = vmatprep.subr.bf16.mxu0 0
    %153 = vmatpush1.bf16.msra.mxu0 0
    %154 = vmatprep.mubr.bf16.mxu0 0
    %155 = vmatmul.mubr.bf16.gmra.mrb[0].mxu0 %v120
    %v156 = vpop.f32.mrb[0].mxu0
    %v157 = vadd.f32 0.0, %v156
    %v158 = vpop.f32.mrb[0].mxu0
    %v159 = vpop.f32.mrb[0].mxu0
    %v160 = vpop.f32.mrb[0].mxu0
    %161 = vdwg.mxu0
    %v162 = vpack.c.bf16 %v157, %v157
    %v163 = vld [vmem:[%s2] sm:$0xff]
    %v164 = vpack.c.bf16 %v163, %v163
    %v165 = vld [vmem:[%s6] sm:$0xf]
    %v166 = vld [vmem:[%s6 + $0x4] sm:$0xf]
    %v167 = vld [vmem:[%s6 + $0x8] sm:$0xf]
    %v168 = vld [vmem:[%s6 + $0xc] sm:$0xf]
    %v173 = vunpack.c.l.b16 %v165
    %v174 = vunpack.c.l.b16 %v166
    %v175 = vunpack.c.l.b16 %v167
    %v176 = vunpack.c.l.b16 %v168
    %v177 = vpack.c.b16 %v174, %v173
    %v178 = vpack.c.b16 %v176, %v175
    %v182 = vsel %vm118, %v164, 0
    %184 = vmatprep.subr.bf16.mxu0 0
    %185 = vmatpush1.bf16.msra.mxu0 %v177
    %186 = vmatprep.subr.bf16.mxu0 0
    %187 = vmatpush1.bf16.msra.mxu0 %v178
    %188 = vmatprep.subr.bf16.mxu0 0
    %189 = vmatpush1.bf16.msra.mxu0 0
    %190 = vmatprep.subr.bf16.mxu0 0
    %191 = vmatpush1.bf16.msra.mxu0 0
    %192 = vmatprep.subr.bf16.mxu0 0
    %193 = vmatpush1.bf16.msra.mxu0 0
    %194 = vmatprep.subr.bf16.mxu0 0
    %195 = vmatpush1.bf16.msra.mxu0 0
    %196 = vmatprep.subr.bf16.mxu0 0
    %197 = vmatpush1.bf16.msra.mxu0 0
    %198 = vmatprep.subr.bf16.mxu0 0
    %199 = vmatpush1.bf16.msra.mxu0 0
    %200 = vmatprep.subr.bf16.mxu0 0
    %201 = vmatpush1.bf16.msra.mxu0 0
    %202 = vmatprep.subr.bf16.mxu0 0
    %203 = vmatpush1.bf16.msra.mxu0 0
    %204 = vmatprep.subr.bf16.mxu0 0
    %205 = vmatpush1.bf16.msra.mxu0 0
    %206 = vmatprep.subr.bf16.mxu0 0
    %207 = vmatpush1.bf16.msra.mxu0 0
    %208 = vmatprep.subr.bf16.mxu0 0
    %209 = vmatpush1.bf16.msra.mxu0 0
    %210 = vmatprep.subr.bf16.mxu0 0
    %211 = vmatpush1.bf16.msra.mxu0 0
    %212 = vmatprep.subr.bf16.mxu0 0
    %213 = vmatpush1.bf16.msra.mxu0 0
    %214 = vmatprep.subr.bf16.mxu0 0
    %215 = vmatpush1.bf16.msra.mxu0 0
    %216 = vmatprep.mubr.bf16.mxu0 0
    %217 = vmatmul.mubr.bf16.gmra.mrb[0].mxu0 %v182
    %v218 = vpop.f32.mrb[0].mxu0
    %v219 = vadd.f32 0.0, %v218
    %v220 = vpop.f32.mrb[0].mxu0
    %v221 = vpop.f32.mrb[0].mxu0
    %v222 = vpop.f32.mrb[0].mxu0
    %223 = vdwg.mxu0
    %v224 = vld [vmem:[%s7] sm:$0xf]
    %v225 = vld [vmem:[%s7 + $0x4] sm:$0xf]
    %v226 = vld [vmem:[%s7 + $0x8] sm:$0xf]
    %v227 = vld [vmem:[%s7 + $0xc] sm:$0xf]
    %v232 = vunpack.c.l.b16 %v224
    %v233 = vunpack.c.l.b16 %v225
    %v234 = vunpack.c.l.b16 %v226
    %v235 = vunpack.c.l.b16 %v227
    %v236 = vpack.c.b16 %v233, %v232
    %v237 = vpack.c.b16 %v235, %v234
    %240 = vmatprep.subr.bf16.mxu0 0
    %241 = vmatpush1.bf16.msra.mxu0 %v236
    %242 = vmatprep.subr.bf16.mxu0 0
    %243 = vmatpush1.bf16.msra.mxu0 %v237
    %244 = vmatprep.subr.bf16.mxu0 0
    %245 = vmatpush1.bf16.msra.mxu0 0
    %246 = vmatprep.subr.bf16.mxu0 0
    %247 = vmatpush1.bf16.msra.mxu0 0
    %248 = vmatprep.subr.bf16.mxu0 0
    %249 = vmatpush1.bf16.msra.mxu0 0
    %250 = vmatprep.subr.bf16.mxu0 0
    %251 = vmatpush1.bf16.msra.mxu0 0
    %252 = vmatprep.subr.bf16.mxu0 0
    %253 = vmatpush1.bf16.msra.mxu0 0
    %254 = vmatprep.subr.bf16.mxu0 0
    %255 = vmatpush1.bf16.msra.mxu0 0
    %256 = vmatprep.subr.bf16.mxu0 0
    %257 = vmatpush1.bf16.msra.mxu0 0
    %258 = vmatprep.subr.bf16.mxu0 0
    %259 = vmatpush1.bf16.msra.mxu0 0
    %260 = vmatprep.subr.bf16.mxu0 0
    %261 = vmatpush1.bf16.msra.mxu0 0
    %262 = vmatprep.subr.bf16.mxu0 0
    %263 = vmatpush1.bf16.msra.mxu0 0
    %264 = vmatprep.subr.bf16.mxu0 0
    %265 = vmatpush1.bf16.msra.mxu0 0
    %266 = vmatprep.subr.bf16.mxu0 0
    %267 = vmatpush1.bf16.msra.mxu0 0
    %268 = vmatprep.subr.bf16.mxu0 0
    %269 = vmatpush1.bf16.msra.mxu0 0
    %270 = vmatprep.subr.bf16.mxu0 0
    %271 = vmatpush1.bf16.msra.mxu0 0
    %272 = vmatprep.mubr.bf16.mxu0 0
    %273 = vmatmul.mubr.bf16.gmra.mrb[0].mxu0 %v182
    %v274 = vpop.f32.mrb[0].mxu0
    %v275 = vadd.f32 0.0, %v274
    %v276 = vpop.f32.mrb[0].mxu0
    %v277 = vpop.f32.mrb[0].mxu0
    %v278 = vpop.f32.mrb[0].mxu0
    %279 = vdwg.mxu0
    %v280 = vld [vmem:[%s8] sm:$0xf]
    %v281 = vld [vmem:[%s8 + $0x4] sm:$0xf]
    %v282 = vld [vmem:[%s8 + $0x8] sm:$0xf]
    %v283 = vld [vmem:[%s8 + $0xc] sm:$0xf]
    %v284 = vld [vmem:[%s3] sm:$0xf]
    %v285 = vld [vmem:[%s3 + $0x4] sm:$0xf]
    %v286 = vld [vmem:[%s4] sm:$0xf]
    %v287 = vld [vmem:[%s4 + $0x4] sm:$0xf]
    %v288 = vld [vmem:[%s5] sm:$0xf]
    %v289 = vld [vmem:[%s5 + $0x4] sm:$0xf]
    %v292 = vunpack.c.l.b16 %v284
    %v293 = vunpack.c.l.b16 %v285
    %v294 = vpack.c.b16 %v293, %v292
    %vm296 = vcmask 130048
    %v298 = vsel %vm296, %v162, 0
    %300 = vmatprep.subr.bf16.mxu0 0
    %301 = vmatpush1.bf16.msra.mxu0 %v294
    %302 = vmatprep.subr.bf16.mxu0 0
    %303 = vmatpush1.bf16.msra.mxu0 0
    %304 = vmatprep.subr.bf16.mxu0 0
    %305 = vmatpush1.bf16.msra.mxu0 0
    %306 = vmatprep.subr.bf16.mxu0 0
    %307 = vmatpush1.bf16.msra.mxu0 0
    %308 = vmatprep.subr.bf16.mxu0 0
    %309 = vmatpush1.bf16.msra.mxu0 0
    %310 = vmatprep.subr.bf16.mxu0 0
    %311 = vmatpush1.bf16.msra.mxu0 0
    %312 = vmatprep.subr.bf16.mxu0 0
    %313 = vmatpush1.bf16.msra.mxu0 0
    %314 = vmatprep.subr.bf16.mxu0 0
    %315 = vmatpush1.bf16.msra.mxu0 0
    %316 = vmatprep.subr.bf16.mxu0 0
    %317 = vmatpush1.bf16.msra.mxu0 0
    %318 = vmatprep.subr.bf16.mxu0 0
    %319 = vmatpush1.bf16.msra.mxu0 0
    %320 = vmatprep.subr.bf16.mxu0 0
    %321 = vmatpush1.bf16.msra.mxu0 0
    %322 = vmatprep.subr.bf16.mxu0 0
    %323 = vmatpush1.bf16.msra.mxu0 0
    %324 = vmatprep.subr.bf16.mxu0 0
    %325 = vmatpush1.bf16.msra.mxu0 0
    %326 = vmatprep.subr.bf16.mxu0 0
    %327 = vmatpush1.bf16.msra.mxu0 0
    %328 = vmatprep.subr.bf16.mxu0 0
    %329 = vmatpush1.bf16.msra.mxu0 0
    %330 = vmatprep.subr.bf16.mxu0 0
    %331 = vmatpush1.bf16.msra.mxu0 0
    %332 = vmatprep.mubr.bf16.mxu0 0
    %333 = vmatmul.mubr.bf16.gmra.mrb[0].mxu0 %v298
    %v334 = vpop.f32.mrb[0].mxu0
    %v335 = vadd.f32 %v219, %v334
    %v336 = vpop.f32.mrb[0].mxu0
    %v337 = vpop.f32.mrb[0].mxu0
    %v338 = vpop.f32.mrb[0].mxu0
    %339 = vdwg.mxu0
    %v340 = vld [vmem:[#allocation2] sm:$0x1]
    %v342 = vlaneseq
    %v343 = vshrl.u32 %v342, 7
    %v344 = vsub.s32 0, %v343
    %v345 = vrot.slane %v340, %v344
    %v347 = vadd.f32 %v335, %v345
    %v348 = vxor.u32 %v347, 2147483648
    %v349 = vmul.f32 %v348, 1.442695
    %v350 = vpow.pop %v349
    %v351 = vadd.f32 %v350, 1.0
    %v352 = vrcp.pop %v351
    %v353 = vmul.f32 1.0, %v352
    %v356 = vunpack.c.l.b16 %v286
    %v357 = vunpack.c.l.b16 %v287
    %v358 = vpack.c.b16 %v357, %v356
    %360 = vmatprep.subr.bf16.mxu0 0
    %361 = vmatpush1.bf16.msra.mxu0 %v358
    %362 = vmatprep.subr.bf16.mxu0 0
    %363 = vmatpush1.bf16.msra.mxu0 0
    %364 = vmatprep.subr.bf16.mxu0 0
    %365 = vmatpush1.bf16.msra.mxu0 0
    %366 = vmatprep.subr.bf16.mxu0 0
    %367 = vmatpush1.bf16.msra.mxu0 0
    %368 = vmatprep.subr.bf16.mxu0 0
    %369 = vmatpush1.bf16.msra.mxu0 0
    %370 = vmatprep.subr.bf16.mxu0 0
    %371 = vmatpush1.bf16.msra.mxu0 0
    %372 = vmatprep.subr.bf16.mxu0 0
    %373 = vmatpush1.bf16.msra.mxu0 0
    %374 = vmatprep.subr.bf16.mxu0 0
    %375 = vmatpush1.bf16.msra.mxu0 0
    %376 = vmatprep.subr.bf16.mxu0 0
    %377 = vmatpush1.bf16.msra.mxu0 0
    %378 = vmatprep.subr.bf16.mxu0 0
    %379 = vmatpush1.bf16.msra.mxu0 0
    %380 = vmatprep.subr.bf16.mxu0 0
    %381 = vmatpush1.bf16.msra.mxu0 0
    %382 = vmatprep.subr.bf16.mxu0 0
    %383 = vmatpush1.bf16.msra.mxu0 0
    %384 = vmatprep.subr.bf16.mxu0 0
    %385 = vmatpush1.bf16.msra.mxu0 0
    %386 = vmatprep.subr.bf16.mxu0 0
    %387 = vmatpush1.bf16.msra.mxu0 0
    %388 = vmatprep.subr.bf16.mxu0 0
    %389 = vmatpush1.bf16.msra.mxu0 0
    %390 = vmatprep.subr.bf16.mxu0 0
    %391 = vmatpush1.bf16.msra.mxu0 0
    %392 = vmatprep.mubr.bf16.mxu0 0
    %393 = vmatmul.mubr.bf16.gmra.mrb[0].mxu0 %v298
    %v394 = vpop.f32.mrb[0].mxu0
    %v395 = vadd.f32 %v275, %v394
    %v396 = vpop.f32.mrb[0].mxu0
    %v397 = vpop.f32.mrb[0].mxu0
    %v398 = vpop.f32.mrb[0].mxu0
    %399 = vdwg.mxu0
    %v400 = vld [vmem:[#allocation4] sm:$0x1]
    %v402 = vlaneseq
    %v403 = vshrl.u32 %v402, 7
    %v404 = vsub.s32 0, %v403
    %v405 = vrot.slane %v400, %v404
    %v407 = vadd.f32 %v395, %v405
    %v408 = vxor.u32 %v407, 2147483648
    %v409 = vmul.f32 %v408, 1.442695
    %v410 = vpow.pop %v409
    %v411 = vadd.f32 %v410, 1.0
    %v412 = vrcp.pop %v411
    %v413 = vmul.f32 1.0, %v412
    %v414 = vld [vmem:[#allocation6] sm:$0x1]
    %v416 = vlaneseq
    %v417 = vshrl.u32 %v416, 7
    %v418 = vsub.s32 0, %v417
    %v419 = vrot.slane %v414, %v418
    %v423 = vunpack.c.l.b16 %v288
    %v424 = vunpack.c.l.b16 %v289
    %v425 = vpack.c.b16 %v424, %v423
    %427 = vmatprep.subr.bf16.mxu0 0
    %428 = vmatpush1.bf16.msra.mxu0 %v425
    %429 = vmatprep.subr.bf16.mxu0 0
    %430 = vmatpush1.bf16.msra.mxu0 0
    %431 = vmatprep.subr.bf16.mxu0 0
    %432 = vmatpush1.bf16.msra.mxu0 0
    %433 = vmatprep.subr.bf16.mxu0 0
    %434 = vmatpush1.bf16.msra.mxu0 0
    %435 = vmatprep.subr.bf16.mxu0 0
    %436 = vmatpush1.bf16.msra.mxu0 0
    %437 = vmatprep.subr.bf16.mxu0 0
    %438 = vmatpush1.bf16.msra.mxu0 0
    %439 = vmatprep.subr.bf16.mxu0 0
    %440 = vmatpush1.bf16.msra.mxu0 0
    %441 = vmatprep.subr.bf16.mxu0 0
    %442 = vmatpush1.bf16.msra.mxu0 0
    %443 = vmatprep.subr.bf16.mxu0 0
    %444 = vmatpush1.bf16.msra.mxu0 0
    %445 = vmatprep.subr.bf16.mxu0 0
    %446 = vmatpush1.bf16.msra.mxu0 0
    %447 = vmatprep.subr.bf16.mxu0 0
    %448 = vmatpush1.bf16.msra.mxu0 0
    %449 = vmatprep.subr.bf16.mxu0 0
    %450 = vmatpush1.bf16.msra.mxu0 0
    %451 = vmatprep.subr.bf16.mxu0 0
    %452 = vmatpush1.bf16.msra.mxu0 0
    %453 = vmatprep.subr.bf16.mxu0 0
    %454 = vmatpush1.bf16.msra.mxu0 0
    %455 = vmatprep.subr.bf16.mxu0 0
    %456 = vmatpush1.bf16.msra.mxu0 0
    %457 = vmatprep.subr.bf16.mxu0 0
    %458 = vmatpush1.bf16.msra.mxu0 0
    %459 = vmatprep.mubr.bf16.mxu0 0
    %460 = vmatmul.mubr.bf16.gmra.mrb[0].mxu0 %v298
    %v461 = vpop.f32.mrb[0].mxu0
    %v462 = vadd.f32 %v419, %v461
    %v463 = vpop.f32.mrb[0].mxu0
    %v464 = vpop.f32.mrb[0].mxu0
    %v465 = vpop.f32.mrb[0].mxu0
    %466 = vdwg.mxu0
    %v467 = vld [vmem:[#allocation7] sm:$0x1]
    %v469 = vlaneseq
    %v470 = vshrl.u32 %v469, 7
    %v471 = vsub.s32 0, %v470
    %v472 = vrot.slane %v467, %v471
    %v478 = vunpack.c.l.b16 %v280
    %v479 = vunpack.c.l.b16 %v281
    %v480 = vunpack.c.l.b16 %v282
    %v481 = vunpack.c.l.b16 %v283
    %v482 = vpack.c.b16 %v479, %v478
    %v483 = vpack.c.b16 %v481, %v480
    %486 = vmatprep.subr.bf16.mxu0 0
    %487 = vmatpush1.bf16.msra.mxu0 %v482
    %488 = vmatprep.subr.bf16.mxu0 0
    %489 = vmatpush1.bf16.msra.mxu0 %v483
    %490 = vmatprep.subr.bf16.mxu0 0
    %491 = vmatpush1.bf16.msra.mxu0 0
    %492 = vmatprep.subr.bf16.mxu0 0
    %493 = vmatpush1.bf16.msra.mxu0 0
    %494 = vmatprep.subr.bf16.mxu0 0
    %495 = vmatpush1.bf16.msra.mxu0 0
    %496 = vmatprep.subr.bf16.mxu0 0
    %497 = vmatpush1.bf16.msra.mxu0 0
    %498 = vmatprep.subr.bf16.mxu0 0
    %499 = vmatpush1.bf16.msra.mxu0 0
    %500 = vmatprep.subr.bf16.mxu0 0
    %501 = vmatpush1.bf16.msra.mxu0 0
    %502 = vmatprep.subr.bf16.mxu0 0
    %503 = vmatpush1.bf16.msra.mxu0 0
    %504 = vmatprep.subr.bf16.mxu0 0
    %505 = vmatpush1.bf16.msra.mxu0 0
    %506 = vmatprep.subr.bf16.mxu0 0
    %507 = vmatpush1.bf16.msra.mxu0 0
    %508 = vmatprep.subr.bf16.mxu0 0
    %509 = vmatpush1.bf16.msra.mxu0 0
    %510 = vmatprep.subr.bf16.mxu0 0
    %511 = vmatpush1.bf16.msra.mxu0 0
    %512 = vmatprep.subr.bf16.mxu0 0
    %513 = vmatpush1.bf16.msra.mxu0 0
    %514 = vmatprep.subr.bf16.mxu0 0
    %515 = vmatpush1.bf16.msra.mxu0 0
    %516 = vmatprep.subr.bf16.mxu0 0
    %517 = vmatpush1.bf16.msra.mxu0 0
    %518 = vmatprep.mubr.bf16.mxu0 0
    %519 = vmatmul.mubr.bf16.gmra.mrb[0].mxu0 %v182
    %v520 = vpop.f32.mrb[0].mxu0
    %v521 = vadd.f32 %v472, %v520
    %v522 = vpop.f32.mrb[0].mxu0
    %v523 = vpop.f32.mrb[0].mxu0
    %v524 = vpop.f32.mrb[0].mxu0
    %525 = vdwg.mxu0
    %v526 = vmul.f32 %v353, %v521
    %v527 = vadd.f32 %v462, %v526
    %v528 = vtanh.pop %v527
    %v529 = vsub.f32 1.0, %v413
    %v530 = vmul.f32 %v529, %v528
    %v531 = vmul.f32 %v413, %v163
    %v532 = vadd.f32 %v530, %v531
    %533 = vst.msk [vmem:[%s13] sm:$0xff] %vm118, %v532
    // Predicated region
    $region70: #{decoder_rnn_forward.2} parent=1 // pred_check
      _
    $region71: #{decoder_rnn_forward.2} parent=1 // pred_check_branch
      %535 = sbr.rel (0) target = $region73
    $region72: #{decoder_rnn_forward.2} parent=1 // pred_region
      _
    $region73: #{decoder_rnn_forward.2} parent=1 // pred_fallthru
      _
    // Predicated region
    $region74: #{decoder_rnn_forward.2} parent=1 // pred_check
      _
    $region75: #{decoder_rnn_forward.2} parent=1 // pred_check_branch
      %537 = sbr.rel (0) target = $region77
    $region76: #{decoder_rnn_forward.2} parent=1 // pred_region
      _
    $region77: #{decoder_rnn_forward.2} parent=1 // pred_fallthru
      _
    %538 = vsyncpa [#allocation3], 1
    %539 = vsyncpa [#allocation5], 1
    %540 = vsyncpa [#allocation8], 1

</llo_original>
